<compile_context>
chip_gen: v7x
topology: tpu7x:2x2x1
jax: 0.10.0
libtpu: 0.0.40
codegen_flags: <defaults>
</compile_context>

<pallas_src>
import jax
import jax.numpy as jnp
from jax.experimental import pallas as pl
from jax.experimental.pallas import tpu as pltpu

IN_FEATURES = 28 * 28          # 784
HIDDEN = 64
OUT_FEATURES = 10
OUT_PAD = 128                  # lane-dense padded output width
MAX_TILE_B = 4096              # fits v7x 64 MiB VMEM with f32 x double-buffered


def _round_up(x: int, m: int) -> int:
    return ((x + m - 1) // m) * m


def mlp_kernel(x_ref, w1_ref, b1_ref, w2_ref, b2_ref, w3_ref, b3_ref, o_ref):
    """Fused 3-layer MLP forward on one batch tile.

    x_ref : (TILE_B, 784)   input dtype (f32 or bf16)  VMEM
    w1_ref: (784, 64)       bfloat16  VMEM (pre-transposed)
    b1_ref: (1, 64)         float32   VMEM
    w2_ref: (64, 64)        bfloat16  VMEM (pre-transposed)
    b2_ref: (1, 64)         float32   VMEM
    w3_ref: (64, 128)       bfloat16  VMEM (pre-transposed, zero-padded cols 10..127)
    b3_ref: (1, 128)        float32   VMEM (zero-padded)
    o_ref : (TILE_B, 128)   bfloat16  VMEM (lane-dense; cols 10..127 are pad)
    """
    # Cast to bf16 in-kernel (free on the VPU) instead of in the wrapper.
    x = x_ref[...].astype(jnp.bfloat16)

    # Layer 1: Linear(784, 64) + ReLU   (bf16 MXU inputs, f32 accumulation)
    h1 = jnp.dot(x, w1_ref[...], preferred_element_type=jnp.float32) + b1_ref[...]
    h1 = jnp.maximum(h1, 0.0).astype(jnp.bfloat16)

    # Layer 2: Linear(64, 64) + ReLU
    h2 = jnp.dot(h1, w2_ref[...], preferred_element_type=jnp.float32) + b2_ref[...]
    h2 = jnp.maximum(h2, 0.0).astype(jnp.bfloat16)

    # Output: Linear(64, 10) written lane-dense as 128 columns (10 real + 118 pad)
    out = jnp.dot(h2, w3_ref[...], preferred_element_type=jnp.float32) + b3_ref[...]
    o_ref[...] = out.astype(o_ref.dtype)


def prepare_params(w1, b1, w2, b2, w3, b3):
    """One-time parameter prep (outside the jitted forward).

    Transposes PyTorch-style (out, in) weights to (in, out), zero-pads the
    output layer to 128 lanes, casts weights to bf16 and biases to (1, out) f32.
    """
    w1t = jnp.asarray(w1, jnp.float32).T.astype(jnp.bfloat16)            # (784, 64)
    w2t = jnp.asarray(w2, jnp.float32).T.astype(jnp.bfloat16)            # (64, 64)
    w3t = jnp.asarray(w3, jnp.float32).T                                  # (64, 10)
    w3p = jnp.zeros((HIDDEN, OUT_PAD), jnp.float32).at[:, :OUT_FEATURES].set(w3t)
    w3p = w3p.astype(jnp.bfloat16)                                        # (64, 128)

    b1r = jnp.asarray(b1, jnp.float32).reshape(1, HIDDEN)                 # (1, 64)
    b2r = jnp.asarray(b2, jnp.float32).reshape(1, HIDDEN)                 # (1, 64)
    b3p = jnp.zeros((1, OUT_PAD), jnp.float32).at[:, :OUT_FEATURES].set(
        jnp.asarray(b3, jnp.float32))                                     # (1, 128)
    return (w1t, b1r, w2t, b2r, w3p, b3p)


@jax.jit
def mlp_forward(x, params):
    """x: (B, 28, 28) or (B, 784), any float dtype (kept native; cast in-kernel).

    Returns lane-padded bf16 logits of shape (B, 128); slice [:, :10] at the
    point of use (keeping the slice lazy avoids an extra strided HBM pass).
    """
    w1t, b1r, w2t, b2r, w3p, b3p = params
    B = x.shape[0]
    x2d = x.reshape(B, IN_FEATURES)          # view-like reshape; no dtype cast

    # Batch tiling (all shapes static at trace time). Round to 16 rows for
    # bf16 sublane packing of the output block; no jnp.pad of x — Pallas
    # partial-last-block handling masks the OOB output rows.
    tile_b = min(MAX_TILE_B, _round_up(B, 16))
    grid = (pl.cdiv(B, tile_b),)

    const = lambda i: (0, 0)   # weights/biases stay VMEM-resident across grid steps

    wbytes = (w1t.size + w2t.size + w3p.size) * 2 \
        + (b1r.size + b2r.size + b3p.size) * 4
    cost = pl.CostEstimate(
        flops=2 * B * (IN_FEATURES * HIDDEN + HIDDEN * HIDDEN + HIDDEN * OUT_PAD),
        transcendentals=0,
        bytes_accessed=B * IN_FEATURES * x2d.dtype.itemsize
                       + B * OUT_PAD * 2
                       + wbytes,
    )

    out_padded = pl.pallas_call(
        mlp_kernel,
        out_shape=jax.ShapeDtypeStruct((B, OUT_PAD), jnp.bfloat16),
        grid=grid,
        in_specs=[
            pl.BlockSpec((tile_b, IN_FEATURES), lambda i: (i, 0)),  # x tile
            pl.BlockSpec((IN_FEATURES, HIDDEN), const),             # w1
            pl.BlockSpec((1, HIDDEN), const),                       # b1
            pl.BlockSpec((HIDDEN, HIDDEN), const),                  # w2
            pl.BlockSpec((1, HIDDEN), const),                       # b2
            pl.BlockSpec((HIDDEN, OUT_PAD), const),                 # w3 (padded)
            pl.BlockSpec((1, OUT_PAD), const),                      # b3 (padded)
        ],
        out_specs=pl.BlockSpec((tile_b, OUT_PAD), lambda i: (i, 0)),
        compiler_params=pltpu.CompilerParams(
            dimension_semantics=("parallel",),
            # ~ double-buffered 4096-row f32 x (24.5 MiB) + bf16 out (2 MiB)
            # + weights; sized to need, fits v7x 64 MiB and v5e's raised scope.
            vmem_limit_bytes=40 * 1024 * 1024,
        ),
        cost_estimate=cost,
    )(x2d, w1t, b1r, w2t, b2r, w3p, b3p)

    return out_padded


def init_linear(key, in_features, out_features):
    """Matches the PyTorch module's init: U(-1/sqrt(in), 1/sqrt(in))."""
    sf = in_features ** -0.5
    kw, kb = jax.random.split(key)
    w = jax.random.uniform(kw, (out_features, in_features), jnp.float32, -sf, sf)
    b = jax.random.uniform(kb, (out_features,), jnp.float32, -sf, sf)
    return w, b


def mlp_reference(x, w1, b1, w2, b2, w3, b3):
    """Pure-JAX float32 reference of the PyTorch forward pass."""
    B = x.shape[0]
    h = x.reshape(B, IN_FEATURES)
    h = jnp.maximum(h @ w1.T + b1, 0.0)
    h = jnp.maximum(h @ w2.T + b2, 0.0)
    return h @ w3.T + b3


if __name__ == "__main__":
    key = jax.random.PRNGKey(0)
    kx, k1, k2, k3 = jax.random.split(key, 4)

    B = 12  # deliberately not a multiple of 16: exercises the partial last block
    x = jax.random.normal(kx, (B, 28, 28), jnp.float32)

    w1, b1 = init_linear(k1, IN_FEATURES, HIDDEN)
    w2, b2 = init_linear(k2, HIDDEN, HIDDEN)
    w3, b3 = init_linear(k3, HIDDEN, OUT_FEATURES)

    params = prepare_params(w1, b1, w2, b2, w3, b3)

    out_padded = mlp_forward(x, params)
    out_padded = jax.block_until_ready(out_padded)

    # Slice the 10 real logits lazily at the point of use.
    out = jnp.asarray(out_padded[:, :OUT_FEATURES], jnp.float32)

    ref = mlp_reference(x, w1, b1, w2, b2, w3, b3)
    assert out.shape == (B, OUT_FEATURES), out.shape
    # bf16 inputs/weights/outputs vs f32 reference -> loosened tolerance.
    assert jnp.allclose(out, ref, atol=5e-2, rtol=5e-2), "mismatch vs reference"

    print("KERNEL_OK")
</pallas_src>

<mosaic_0001>
module attributes {stable_mosaic.version = 11 : i64} {
  func.func @mlp_kernel(%arg0: i32, %arg1: memref<16x784xf32, #tpu.memory_space<vmem>>, %arg2: memref<784x64xbf16, #tpu.memory_space<vmem>>, %arg3: memref<1x64xf32, #tpu.memory_space<vmem>>, %arg4: memref<64x64xbf16, #tpu.memory_space<vmem>>, %arg5: memref<1x64xf32, #tpu.memory_space<vmem>>, %arg6: memref<64x128xbf16, #tpu.memory_space<vmem>>, %arg7: memref<1x128xf32, #tpu.memory_space<vmem>>, %arg8: memref<16x128xbf16, #tpu.memory_space<vmem>>) attributes {dimension_semantics = [#tpu.dimension_semantics<parallel>], iteration_bounds = array<i64: 1>, scalar_prefetch = 0 : i64, scratch_operands = 0 : i64, tpu.core_type = #tpu.core_type<tc>, window_params = [{transform_indices = @transform_0, window_bounds = array<i64: 16, 784>}, {pipeline_mode = #tpu.pipeline_mode<synchronous>, transform_indices = @transform_1, window_bounds = array<i64: 784, 64>}, {pipeline_mode = #tpu.pipeline_mode<synchronous>, transform_indices = @transform_2, window_bounds = array<i64: 1, 64>}, {pipeline_mode = #tpu.pipeline_mode<synchronous>, transform_indices = @transform_3, window_bounds = array<i64: 64, 64>}, {pipeline_mode = #tpu.pipeline_mode<synchronous>, transform_indices = @transform_4, window_bounds = array<i64: 1, 64>}, {pipeline_mode = #tpu.pipeline_mode<synchronous>, transform_indices = @transform_5, window_bounds = array<i64: 64, 128>}, {pipeline_mode = #tpu.pipeline_mode<synchronous>, transform_indices = @transform_6, window_bounds = array<i64: 1, 128>}, {transform_indices = @transform_7, window_bounds = array<i64: 16, 128>}]} {
    %c0 = arith.constant 0 : index
    %c0_0 = arith.constant 0 : index
    %0 = vector.load %arg1[%c0, %c0_0] : memref<16x784xf32, #tpu.memory_space<vmem>>, vector<16x784xf32>
    %1 = arith.truncf %0 : vector<16x784xf32> to vector<16x784xbf16>
    %c0_1 = arith.constant 0 : index
    %c0_2 = arith.constant 0 : index
    %2 = vector.load %arg2[%c0_1, %c0_2] : memref<784x64xbf16, #tpu.memory_space<vmem>>, vector<784x64xbf16>
    %cst = arith.constant dense<0.000000e+00> : vector<16x64xf32>
    %3 = tpu.matmul %1, %2, %cst {dimension_numbers = #tpu.dot_dimension_numbers<[1], [0], [0], [1], [0, 0, 1, 1], [], []>} : vector<16x784xbf16>, vector<784x64xbf16>, vector<16x64xf32> -> vector<16x64xf32>
    %c0_3 = arith.constant 0 : index
    %c0_4 = arith.constant 0 : index
    %4 = vector.load %arg3[%c0_3, %c0_4] : memref<1x64xf32, #tpu.memory_space<vmem>>, vector<1x64xf32>
    %5 = vector.broadcast %4 : vector<1x64xf32> to vector<16x64xf32>
    %6 = arith.addf %3, %5 : vector<16x64xf32>
    %cst_5 = arith.constant 0.000000e+00 : f32
    %7 = vector.broadcast %cst_5 : f32 to vector<16x64xf32>
    %8 = arith.maximumf %6, %7 : vector<16x64xf32>
    %9 = arith.truncf %8 : vector<16x64xf32> to vector<16x64xbf16>
    %c0_6 = arith.constant 0 : index
    %c0_7 = arith.constant 0 : index
    %10 = vector.load %arg4[%c0_6, %c0_7] : memref<64x64xbf16, #tpu.memory_space<vmem>>, vector<64x64xbf16>
    %cst_8 = arith.constant dense<0.000000e+00> : vector<16x64xf32>
    %11 = tpu.matmul %9, %10, %cst_8 {dimension_numbers = #tpu.dot_dimension_numbers<[1], [0], [0], [1], [0, 0, 1, 1], [], []>} : vector<16x64xbf16>, vector<64x64xbf16>, vector<16x64xf32> -> vector<16x64xf32>
    %c0_9 = arith.constant 0 : index
    %c0_10 = arith.constant 0 : index
    %12 = vector.load %arg5[%c0_9, %c0_10] : memref<1x64xf32, #tpu.memory_space<vmem>>, vector<1x64xf32>
    %13 = vector.broadcast %12 : vector<1x64xf32> to vector<16x64xf32>
    %14 = arith.addf %11, %13 : vector<16x64xf32>
    %cst_11 = arith.constant 0.000000e+00 : f32
    %15 = vector.broadcast %cst_11 : f32 to vector<16x64xf32>
    %16 = arith.maximumf %14, %15 : vector<16x64xf32>
    %17 = arith.truncf %16 : vector<16x64xf32> to vector<16x64xbf16>
    %c0_12 = arith.constant 0 : index
    %c0_13 = arith.constant 0 : index
    %18 = vector.load %arg6[%c0_12, %c0_13] : memref<64x128xbf16, #tpu.memory_space<vmem>>, vector<64x128xbf16>
    %cst_14 = arith.constant dense<0.000000e+00> : vector<16x128xf32>
    %19 = tpu.matmul %17, %18, %cst_14 {dimension_numbers = #tpu.dot_dimension_numbers<[1], [0], [0], [1], [0, 0, 1, 1], [], []>} : vector<16x64xbf16>, vector<64x128xbf16>, vector<16x128xf32> -> vector<16x128xf32>
    %c0_15 = arith.constant 0 : index
    %c0_16 = arith.constant 0 : index
    %20 = vector.load %arg7[%c0_15, %c0_16] : memref<1x128xf32, #tpu.memory_space<vmem>>, vector<1x128xf32>
    %21 = vector.broadcast %20 : vector<1x128xf32> to vector<16x128xf32>
    %22 = arith.addf %19, %21 : vector<16x128xf32>
    %23 = arith.truncf %22 : vector<16x128xf32> to vector<16x128xbf16>
    %c0_17 = arith.constant 0 : index
    %c0_18 = arith.constant 0 : index
    %24 = vector.load %arg8[%c0_17, %c0_18] : memref<16x128xbf16, #tpu.memory_space<vmem>>, vector<16x128xbf16>
    tpu.vector_store %arg8[%c0_17, %c0_18], %23 {strides = array<i32>} : memref<16x128xbf16, #tpu.memory_space<vmem>>, vector<16x128xbf16>,
    return
  }
  func.func @transform_0(%arg0: i32) -> (i32, i32) {
    %c0_i32 = arith.constant 0 : i32
    %c0_i32_0 = arith.constant 0 : i32
    return %arg0, %c0_i32 : i32, i32
  }
  func.func @transform_1(%arg0: i32) -> (i32, i32) {
    %c0_i32 = arith.constant 0 : i32
    %c0_i32_0 = arith.constant 0 : i32
    %c0_i32_1 = arith.constant 0 : i32
    return %c0_i32, %c0_i32_0 : i32, i32
  }
  func.func @transform_2(%arg0: i32) -> (i32, i32) {
    %c0_i32 = arith.constant 0 : i32
    %c0_i32_0 = arith.constant 0 : i32
    %c0_i32_1 = arith.constant 0 : i32
    return %c0_i32, %c0_i32_0 : i32, i32
  }
  func.func @transform_3(%arg0: i32) -> (i32, i32) {
    %c0_i32 = arith.constant 0 : i32
    %c0_i32_0 = arith.constant 0 : i32
    %c0_i32_1 = arith.constant 0 : i32
    return %c0_i32, %c0_i32_0 : i32, i32
  }
  func.func @transform_4(%arg0: i32) -> (i32, i32) {
    %c0_i32 = arith.constant 0 : i32
    %c0_i32_0 = arith.constant 0 : i32
    %c0_i32_1 = arith.constant 0 : i32
    return %c0_i32, %c0_i32_0 : i32, i32
  }
  func.func @transform_5(%arg0: i32) -> (i32, i32) {
    %c0_i32 = arith.constant 0 : i32
    %c0_i32_0 = arith.constant 0 : i32
    %c0_i32_1 = arith.constant 0 : i32
    return %c0_i32, %c0_i32_0 : i32, i32
  }
  func.func @transform_6(%arg0: i32) -> (i32, i32) {
    %c0_i32 = arith.constant 0 : i32
    %c0_i32_0 = arith.constant 0 : i32
    %c0_i32_1 = arith.constant 0 : i32
    return %c0_i32, %c0_i32_0 : i32, i32
  }
  func.func @transform_7(%arg0: i32) -> (i32, i32) {
    %c0_i32 = arith.constant 0 : i32
    %c0_i32_0 = arith.constant 0 : i32
    return %arg0, %c0_i32 : i32, i32
  }
}

</mosaic_0001>

<llo_original>
// kernel: mlp_forward.1
$region0: #{mlp_forward.1}
  #allocation0 [shape = 'u32[]', space=smem, size = 0x4, offset = 0x4, fixed_abs, tag = 'smem constant byte address 0x4 - core index']
  #allocation1 [shape = 'u32[144,128]{1,0:T(1,128)}', space=vmem, size = 0x12000, scoped, tag = 'internal scratch']
  %s0 = inlined_call_operand.vmem [shape: f32[12,784], index: 0, kind: input, shape index: {}]
  %s1 = inlined_call_operand.vmem [shape: bf16[784,64], index: 1, kind: input, shape index: {}]
  %s2 = inlined_call_operand.vmem [shape: f32[1,64], index: 2, kind: input, shape index: {}]
  %s3 = inlined_call_operand.vmem [shape: bf16[64,64], index: 3, kind: input, shape index: {}]
  %s4 = inlined_call_operand.vmem [shape: f32[1,64], index: 4, kind: input, shape index: {}]
  %s5 = inlined_call_operand.vmem [shape: bf16[64,128], index: 5, kind: input, shape index: {}]
  %s6 = inlined_call_operand.vmem [shape: f32[1,128], index: 6, kind: input, shape index: {}]
  %s7 = inlined_call_operand.hbm [shape: bf16[12,128], index: 7, kind: output, shape index: {}]
  %s8 = sld [smem:[#allocation0]]
  $region38: #{mlp_forward.1} parent=0
    _
  %s10 = ssub.s32 1, %s8
  %s11 = scalar_select 0, %s10, %s8
  $region1: #{mlp_forward.1} parent=0
    #allocation2 [shape = 'u8[4096]{0}', space=vmem, size = 0x1000, scoped, tag = 'output window, operand 0, single buffered']
    #allocation3 [shape = 's32[1]{0}', space=sflag, size = 0x4, scoped, tag = 'scoped memory for mlp_forward.1']
    %12 = vsyncpa [#allocation3], 0
    // Predicated region
    $region2: #{mlp_forward.1} parent=1 // pred_check
      _
    $region3: #{mlp_forward.1} parent=1 // pred_check_branch
      %14 = sbr.rel (0) target = $region5
    $region4: #{mlp_forward.1} parent=1 // pred_region
      _
    $region5: #{mlp_forward.1} parent=1 // pred_fallthru
      _
    // Predicated region
    $region6: #{mlp_forward.1} parent=1 // pred_check
      _
    $region7: #{mlp_forward.1} parent=1 // pred_check_branch
      %16 = sbr.rel (0) target = $region9
    $region8: #{mlp_forward.1} parent=1 // pred_region
      _
    $region9: #{mlp_forward.1} parent=1 // pred_fallthru
      _
    // Predicated region
    $region10: #{mlp_forward.1} parent=1 // pred_check
      _
    $region11: #{mlp_forward.1} parent=1 // pred_check_branch
      %18 = sbr.rel (0) target = $region13
    $region12: #{mlp_forward.1} parent=1 // pred_region
      _
    $region13: #{mlp_forward.1} parent=1 // pred_fallthru
      _
    // Predicated region
    $region14: #{mlp_forward.1} parent=1 // pred_check
      _
    $region15: #{mlp_forward.1} parent=1 // pred_check_branch
      %20 = sbr.rel (0) target = $region17
    $region16: #{mlp_forward.1} parent=1 // pred_region
      _
    $region17: #{mlp_forward.1} parent=1 // pred_fallthru
      _
    // Predicated region
    $region18: #{mlp_forward.1} parent=1 // pred_check
      _
    $region19: #{mlp_forward.1} parent=1 // pred_check_branch
      %22 = sbr.rel (0) target = $region21
    $region20: #{mlp_forward.1} parent=1 // pred_region
      _
    $region21: #{mlp_forward.1} parent=1 // pred_fallthru
      _
    // Predicated region
    $region22: #{mlp_forward.1} parent=1 // pred_check
      _
    $region23: #{mlp_forward.1} parent=1 // pred_check_branch
      %24 = sbr.rel (0) target = $region25
    $region24: #{mlp_forward.1} parent=1 // pred_region
      _
    $region25: #{mlp_forward.1} parent=1 // pred_fallthru
      _
    // Predicated region
    $region26: #{mlp_forward.1} parent=1 // pred_check
      _
    $region27: #{mlp_forward.1} parent=1 // pred_check_branch
      %26 = sbr.rel (0) target = $region29
    $region28: #{mlp_forward.1} parent=1 // pred_region
      _
    $region29: #{mlp_forward.1} parent=1 // pred_fallthru
      _
    %v28 = vld [vmem:[%s0] sm:$0xff]
    %v29 = vld [vmem:[%s0 + $0x8] sm:$0xff]
    %v30 = vld [vmem:[%s0 + $0x10] sm:$0xff]
    %v31 = vld [vmem:[%s0 + $0x18] sm:$0xff]
    %v32 = vld [vmem:[%s0 + $0x20] sm:$0xff]
    %v33 = vld [vmem:[%s0 + $0x28] sm:$0xff]
    %v34 = vld [vmem:[%s0 + $0x30] sm:$0xff]
    %v35 = vld [vmem:[%s0 + $0x38] sm:$0xff]
    %v36 = vld [vmem:[%s0 + $0x40] sm:$0xff]
    %v37 = vld [vmem:[%s0 + $0x48] sm:$0xff]
    %v38 = vld [vmem:[%s0 + $0x50] sm:$0xff]
    %v39 = vld [vmem:[%s0 + $0x58] sm:$0xff]
    %v40 = vld [vmem:[%s0 + $0x60] sm:$0xff]
    %v41 = vld [vmem:[%s0 + $0x68] sm:$0xff]
    %v42 = vpack.c.bf16 %v35, %v28
    %v43 = vpack.c.bf16 %v36, %v29
    %v44 = vpack.c.bf16 %v37, %v30
    %v45 = vpack.c.bf16 %v38, %v31
    %v46 = vpack.c.bf16 %v39, %v32
    %v47 = vpack.c.bf16 %v40, %v33
    %v48 = vpack.c.bf16 %v41, %v34
    %v49 = vld [vmem:[%s1] sm:$0xf]
    %v50 = vld [vmem:[%s1 + $0x4] sm:$0xf]
    %v51 = vld [vmem:[%s1 + $0x8] sm:$0xf]
    %v52 = vld [vmem:[%s1 + $0xc] sm:$0xf]
    %v53 = vld [vmem:[%s1 + $0x10] sm:$0xf]
    %v54 = vld [vmem:[%s1 + $0x14] sm:$0xf]
    %v55 = vld [vmem:[%s1 + $0x18] sm:$0xf]
    %v56 = vld [vmem:[%s1 + $0x1c] sm:$0xf]
    %v57 = vld [vmem:[%s1 + $0x20] sm:$0xf]
    %v58 = vld [vmem:[%s1 + $0x24] sm:$0xf]
    %v59 = vld [vmem:[%s1 + $0x28] sm:$0xf]
    %v60 = vld [vmem:[%s1 + $0x2c] sm:$0xf]
    %v61 = vld [vmem:[%s1 + $0x30] sm:$0xf]
    %v62 = vld [vmem:[%s1 + $0x34] sm:$0xf]
    %v63 = vld [vmem:[%s1 + $0x38] sm:$0xf]
    %v64 = vld [vmem:[%s1 + $0x3c] sm:$0xf]
    %v65 = vld [vmem:[%s1 + $0x40] sm:$0xf]
    %v66 = vld [vmem:[%s1 + $0x44] sm:$0xf]
    %v67 = vld [vmem:[%s1 + $0x48] sm:$0xf]
    %v68 = vld [vmem:[%s1 + $0x4c] sm:$0xf]
    %v69 = vld [vmem:[%s1 + $0x50] sm:$0xf]
    %v70 = vld [vmem:[%s1 + $0x54] sm:$0xf]
    %v71 = vld [vmem:[%s1 + $0x58] sm:$0xf]
    %v72 = vld [vmem:[%s1 + $0x5c] sm:$0xf]
    %v73 = vld [vmem:[%s1 + $0x60] sm:$0xf]
    %v74 = vld [vmem:[%s1 + $0x64] sm:$0xf]
    %v75 = vld [vmem:[%s1 + $0x68] sm:$0xf]
    %v76 = vld [vmem:[%s1 + $0x6c] sm:$0xf]
    %v77 = vld [vmem:[%s1 + $0x70] sm:$0xf]
    %v78 = vld [vmem:[%s1 + $0x74] sm:$0xf]
    %v79 = vld [vmem:[%s1 + $0x78] sm:$0xf]
    %v80 = vld [vmem:[%s1 + $0x7c] sm:$0xf]
    %v81 = vld [vmem:[%s1 + $0x80] sm:$0xf]
    %v82 = vld [vmem:[%s1 + $0x84] sm:$0xf]
    %v83 = vld [vmem:[%s1 + $0x88] sm:$0xf]
    %v84 = vld [vmem:[%s1 + $0x8c] sm:$0xf]
    %v85 = vld [vmem:[%s1 + $0x90] sm:$0xf]
    %v86 = vld [vmem:[%s1 + $0x94] sm:$0xf]
    %v87 = vld [vmem:[%s1 + $0x98] sm:$0xf]
    %v88 = vld [vmem:[%s1 + $0x9c] sm:$0xf]
    %v89 = vld [vmem:[%s1 + $0xa0] sm:$0xf]
    %v90 = vld [vmem:[%s1 + $0xa4] sm:$0xf]
    %v91 = vld [vmem:[%s1 + $0xa8] sm:$0xf]
    %v92 = vld [vmem:[%s1 + $0xac] sm:$0xf]
    %v93 = vld [vmem:[%s1 + $0xb0] sm:$0xf]
    %v94 = vld [vmem:[%s1 + $0xb4] sm:$0xf]
    %v95 = vld [vmem:[%s1 + $0xb8] sm:$0xf]
    %v96 = vld [vmem:[%s1 + $0xbc] sm:$0xf]
    %v97 = vld [vmem:[%s1 + $0xc0] sm:$0xf]
    %v98 = vld [vmem:[%s1 + $0xc4] sm:$0xf]
    %v99 = vld [vmem:[%s1 + $0xc8] sm:$0xf]
    %v100 = vld [vmem:[%s1 + $0xcc] sm:$0xf]
    %v101 = vld [vmem:[%s1 + $0xd0] sm:$0xf]
    %v102 = vld [vmem:[%s1 + $0xd4] sm:$0xf]
    %v103 = vld [vmem:[%s1 + $0xd8] sm:$0xf]
    %v104 = vld [vmem:[%s1 + $0xdc] sm:$0xf]
    %v105 = vld [vmem:[%s1 + $0xe0] sm:$0xf]
    %v106 = vld [vmem:[%s1 + $0xe4] sm:$0xf]
    %v107 = vld [vmem:[%s1 + $0xe8] sm:$0xf]
    %v108 = vld [vmem:[%s1 + $0xec] sm:$0xf]
    %v109 = vld [vmem:[%s1 + $0xf0] sm:$0xf]
    %v110 = vld [vmem:[%s1 + $0xf4] sm:$0xf]
    %v111 = vld [vmem:[%s1 + $0xf8] sm:$0xf]
    %v112 = vld [vmem:[%s1 + $0xfc] sm:$0xf]
    %v113 = vld [vmem:[%s1 + $0x100] sm:$0xf]
    %v114 = vld [vmem:[%s1 + $0x104] sm:$0xf]
    %v115 = vld [vmem:[%s1 + $0x108] sm:$0xf]
    %v116 = vld [vmem:[%s1 + $0x10c] sm:$0xf]
    %v117 = vld [vmem:[%s1 + $0x110] sm:$0xf]
    %v118 = vld [vmem:[%s1 + $0x114] sm:$0xf]
    %v119 = vld [vmem:[%s1 + $0x118] sm:$0xf]
    %v120 = vld [vmem:[%s1 + $0x11c] sm:$0xf]
    %v121 = vld [vmem:[%s1 + $0x120] sm:$0xf]
    %v122 = vld [vmem:[%s1 + $0x124] sm:$0xf]
    %v123 = vld [vmem:[%s1 + $0x128] sm:$0xf]
    %v124 = vld [vmem:[%s1 + $0x12c] sm:$0xf]
    %v125 = vld [vmem:[%s1 + $0x130] sm:$0xf]
    %v126 = vld [vmem:[%s1 + $0x134] sm:$0xf]
    %v127 = vld [vmem:[%s1 + $0x138] sm:$0xf]
    %v128 = vld [vmem:[%s1 + $0x13c] sm:$0xf]
    %v129 = vld [vmem:[%s1 + $0x140] sm:$0xf]
    %v130 = vld [vmem:[%s1 + $0x144] sm:$0xf]
    %v131 = vld [vmem:[%s1 + $0x148] sm:$0xf]
    %v132 = vld [vmem:[%s1 + $0x14c] sm:$0xf]
    %v133 = vld [vmem:[%s1 + $0x150] sm:$0xf]
    %v134 = vld [vmem:[%s1 + $0x154] sm:$0xf]
    %v135 = vld [vmem:[%s1 + $0x158] sm:$0xf]
    %v136 = vld [vmem:[%s1 + $0x15c] sm:$0xf]
    %v137 = vld [vmem:[%s1 + $0x160] sm:$0xf]
    %v138 = vld [vmem:[%s1 + $0x164] sm:$0xf]
    %v139 = vld [vmem:[%s1 + $0x168] sm:$0xf]
    %v140 = vld [vmem:[%s1 + $0x16c] sm:$0xf]
    %v141 = vld [vmem:[%s1 + $0x170] sm:$0xf]
    %v142 = vld [vmem:[%s1 + $0x174] sm:$0xf]
    %v143 = vld [vmem:[%s1 + $0x178] sm:$0xf]
    %v144 = vld [vmem:[%s1 + $0x17c] sm:$0xf]
    %v145 = vld [vmem:[%s1 + $0x180] sm:$0xf]
    %v146 = vld [vmem:[%s1 + $0x184] sm:$0xf]
    %v147 = vld [vmem:[%s2] sm:$0x1]
    %v149 = vlaneseq
    %v150 = vshrl.u32 %v149, 7
    %v151 = vsub.s32 0, %v150
    %v152 = vrot.slane %v147, %v151
    %v252 = vunpack.c.l.b16 %v49
    %v253 = vunpack.c.l.b16 %v50
    %v254 = vunpack.c.l.b16 %v51
    %v255 = vunpack.c.l.b16 %v52
    %v256 = vunpack.c.l.b16 %v53
    %v257 = vunpack.c.l.b16 %v54
    %v258 = vunpack.c.l.b16 %v55
    %v259 = vunpack.c.l.b16 %v56
    %v260 = vunpack.c.l.b16 %v57
    %v261 = vunpack.c.l.b16 %v58
    %v262 = vunpack.c.l.b16 %v59
    %v263 = vunpack.c.l.b16 %v60
    %v264 = vunpack.c.l.b16 %v61
    %v265 = vunpack.c.l.b16 %v62
    %v266 = vunpack.c.l.b16 %v63
    %v267 = vunpack.c.l.b16 %v64
    %v268 = vunpack.c.l.b16 %v65
    %v269 = vunpack.c.l.b16 %v66
    %v270 = vunpack.c.l.b16 %v67
    %v271 = vunpack.c.l.b16 %v68
    %v272 = vunpack.c.l.b16 %v69
    %v273 = vunpack.c.l.b16 %v70
    %v274 = vunpack.c.l.b16 %v71
    %v275 = vunpack.c.l.b16 %v72
    %v276 = vunpack.c.l.b16 %v73
    %v277 = vunpack.c.l.b16 %v74
    %v278 = vunpack.c.l.b16 %v75
    %v279 = vunpack.c.l.b16 %v76
    %v280 = vunpack.c.l.b16 %v77
    %v281 = vunpack.c.l.b16 %v78
    %v282 = vunpack.c.l.b16 %v79
    %v283 = vunpack.c.l.b16 %v80
    %v284 = vunpack.c.l.b16 %v81
    %v285 = vunpack.c.l.b16 %v82
    %v286 = vunpack.c.l.b16 %v83
    %v287 = vunpack.c.l.b16 %v84
    %v288 = vunpack.c.l.b16 %v85
    %v289 = vunpack.c.l.b16 %v86
    %v290 = vunpack.c.l.b16 %v87
    %v291 = vunpack.c.l.b16 %v88
    %v292 = vunpack.c.l.b16 %v89
    %v293 = vunpack.c.l.b16 %v90
    %v294 = vunpack.c.l.b16 %v91
    %v295 = vunpack.c.l.b16 %v92
    %v296 = vunpack.c.l.b16 %v93
    %v297 = vunpack.c.l.b16 %v94
    %v298 = vunpack.c.l.b16 %v95
    %v299 = vunpack.c.l.b16 %v96
    %v300 = vunpack.c.l.b16 %v97
    %v301 = vunpack.c.l.b16 %v98
    %v302 = vunpack.c.l.b16 %v99
    %v303 = vunpack.c.l.b16 %v100
    %v304 = vunpack.c.l.b16 %v101
    %v305 = vunpack.c.l.b16 %v102
    %v306 = vunpack.c.l.b16 %v103
    %v307 = vunpack.c.l.b16 %v104
    %v308 = vunpack.c.l.b16 %v105
    %v309 = vunpack.c.l.b16 %v106
    %v310 = vunpack.c.l.b16 %v107
    %v311 = vunpack.c.l.b16 %v108
    %v312 = vunpack.c.l.b16 %v109
    %v313 = vunpack.c.l.b16 %v110
    %v314 = vunpack.c.l.b16 %v111
    %v315 = vunpack.c.l.b16 %v112
    %v316 = vunpack.c.l.b16 %v113
    %v317 = vunpack.c.l.b16 %v114
    %v318 = vunpack.c.l.b16 %v115
    %v319 = vunpack.c.l.b16 %v116
    %v320 = vunpack.c.l.b16 %v117
    %v321 = vunpack.c.l.b16 %v118
    %v322 = vunpack.c.l.b16 %v119
    %v323 = vunpack.c.l.b16 %v120
    %v324 = vunpack.c.l.b16 %v121
    %v325 = vunpack.c.l.b16 %v122
    %v326 = vunpack.c.l.b16 %v123
    %v327 = vunpack.c.l.b16 %v124
    %v328 = vunpack.c.l.b16 %v125
    %v329 = vunpack.c.l.b16 %v126
    %v330 = vunpack.c.l.b16 %v127
    %v331 = vunpack.c.l.b16 %v128
    %v332 = vunpack.c.l.b16 %v129
    %v333 = vunpack.c.l.b16 %v130
    %v334 = vunpack.c.l.b16 %v131
    %v335 = vunpack.c.l.b16 %v132
    %v336 = vunpack.c.l.b16 %v133
    %v337 = vunpack.c.l.b16 %v134
    %v338 = vunpack.c.l.b16 %v135
    %v339 = vunpack.c.l.b16 %v136
    %v340 = vunpack.c.l.b16 %v137
    %v341 = vunpack.c.l.b16 %v138
    %v342 = vunpack.c.l.b16 %v139
    %v343 = vunpack.c.l.b16 %v140
    %v344 = vunpack.c.l.b16 %v141
    %v345 = vunpack.c.l.b16 %v142
    %v346 = vunpack.c.l.b16 %v143
    %v347 = vunpack.c.l.b16 %v144
    %v348 = vunpack.c.l.b16 %v145
    %v349 = vunpack.c.l.b16 %v146
    %v350 = vpack.c.b16 %v253, %v252
    %v351 = vpack.c.b16 %v255, %v254
    %v352 = vpack.c.b16 %v257, %v256
    %v353 = vpack.c.b16 %v259, %v258
    %v354 = vpack.c.b16 %v261, %v260
    %v355 = vpack.c.b16 %v263, %v262
    %v356 = vpack.c.b16 %v265, %v264
    %v357 = vpack.c.b16 %v267, %v266
    %v358 = vpack.c.b16 %v269, %v268
    %v359 = vpack.c.b16 %v271, %v270
    %v360 = vpack.c.b16 %v273, %v272
    %v361 = vpack.c.b16 %v275, %v274
    %v362 = vpack.c.b16 %v277, %v276
    %v363 = vpack.c.b16 %v279, %v278
    %v364 = vpack.c.b16 %v281, %v280
    %v365 = vpack.c.b16 %v283, %v282
    %v366 = vpack.c.b16 %v285, %v284
    %v367 = vpack.c.b16 %v287, %v286
    %v368 = vpack.c.b16 %v289, %v288
    %v369 = vpack.c.b16 %v291, %v290
    %v370 = vpack.c.b16 %v293, %v292
    %v371 = vpack.c.b16 %v295, %v294
    %v372 = vpack.c.b16 %v297, %v296
    %v373 = vpack.c.b16 %v299, %v298
    %v374 = vpack.c.b16 %v301, %v300
    %v375 = vpack.c.b16 %v303, %v302
    %v376 = vpack.c.b16 %v305, %v304
    %v377 = vpack.c.b16 %v307, %v306
    %v378 = vpack.c.b16 %v309, %v308
    %v379 = vpack.c.b16 %v311, %v310
    %v380 = vpack.c.b16 %v313, %v312
    %v381 = vpack.c.b16 %v315, %v314
    %v382 = vpack.c.b16 %v317, %v316
    %v383 = vpack.c.b16 %v319, %v318
    %v384 = vpack.c.b16 %v321, %v320
    %v385 = vpack.c.b16 %v323, %v322
    %v386 = vpack.c.b16 %v325, %v324
    %v387 = vpack.c.b16 %v327, %v326
    %v388 = vpack.c.b16 %v329, %v328
    %v389 = vpack.c.b16 %v331, %v330
    %v390 = vpack.c.b16 %v333, %v332
    %v391 = vpack.c.b16 %v335, %v334
    %v392 = vpack.c.b16 %v337, %v336
    %v393 = vpack.c.b16 %v339, %v338
    %v394 = vpack.c.b16 %v341, %v340
    %v395 = vpack.c.b16 %v343, %v342
    %v396 = vpack.c.b16 %v345, %v344
    %v397 = vpack.c.b16 %v347, %v346
    %v398 = vpack.c.b16 %v349, %v348
    %vm448 = vcmask 130048
    %v450 = vsel %vm448, %v48, 0
    %452 = vmatprep.subr.bf16.mxu0 0
    %453 = vmatpush1.bf16.msra.mxu0 %v350
    %454 = vmatprep.subr.bf16.mxu0 0
    %455 = vmatpush1.bf16.msra.mxu0 %v351
    %456 = vmatprep.subr.bf16.mxu0 0
    %457 = vmatpush1.bf16.msra.mxu0 %v352
    %458 = vmatprep.subr.bf16.mxu0 0
    %459 = vmatpush1.bf16.msra.mxu0 %v353
    %460 = vmatprep.subr.bf16.mxu0 0
    %461 = vmatpush1.bf16.msra.mxu0 %v354
    %462 = vmatprep.subr.bf16.mxu0 0
    %463 = vmatpush1.bf16.msra.mxu0 %v355
    %464 = vmatprep.subr.bf16.mxu0 0
    %465 = vmatpush1.bf16.msra.mxu0 %v356
    %466 = vmatprep.subr.bf16.mxu0 0
    %467 = vmatpush1.bf16.msra.mxu0 %v357
    %468 = vmatprep.subr.bf16.mxu0 0
    %469 = vmatpush1.bf16.msra.mxu0 %v358
    %470 = vmatprep.subr.bf16.mxu0 0
    %471 = vmatpush1.bf16.msra.mxu0 %v359
    %472 = vmatprep.subr.bf16.mxu0 0
    %473 = vmatpush1.bf16.msra.mxu0 %v360
    %474 = vmatprep.subr.bf16.mxu0 0
    %475 = vmatpush1.bf16.msra.mxu0 %v361
    %476 = vmatprep.subr.bf16.mxu0 0
    %477 = vmatpush1.bf16.msra.mxu0 %v362
    %478 = vmatprep.subr.bf16.mxu0 0
    %479 = vmatpush1.bf16.msra.mxu0 %v363
    %480 = vmatprep.subr.bf16.mxu0 0
    %481 = vmatpush1.bf16.msra.mxu0 %v364
    %482 = vmatprep.subr.bf16.mxu0 0
    %483 = vmatpush1.bf16.msra.mxu0 %v365
    %484 = vmatprep.mubr.bf16.mxu0 %v43
    %485 = vmatmul.mubr.bf16.gmra.mrb[0].mxu0 %v42
    %v486 = vpop.f32.mrb[0].mxu0
    %v487 = vadd.f32 %v152, %v486
    %v488 = vpop.f32.mrb[0].mxu0
    %v489 = vpop.f32.mrb[0].mxu0
    %v490 = vadd.f32 %v152, %v489
    %v491 = vpop.f32.mrb[0].mxu0
    %492 = vdwg.mxu0
    %493 = vmatprep.subr.bf16.mxu0 0
    %494 = vmatpush1.bf16.msra.mxu0 %v366
    %495 = vmatprep.subr.bf16.mxu0 0
    %496 = vmatpush1.bf16.msra.mxu0 %v367
    %497 = vmatprep.subr.bf16.mxu0 0
    %498 = vmatpush1.bf16.msra.mxu0 %v368
    %499 = vmatprep.subr.bf16.mxu0 0
    %500 = vmatpush1.bf16.msra.mxu0 %v369
    %501 = vmatprep.subr.bf16.mxu0 0
    %502 = vmatpush1.bf16.msra.mxu0 %v370
    %503 = vmatprep.subr.bf16.mxu0 0
    %504 = vmatpush1.bf16.msra.mxu0 %v371
    %505 = vmatprep.subr.bf16.mxu0 0
    %506 = vmatpush1.bf16.msra.mxu0 %v372
    %507 = vmatprep.subr.bf16.mxu0 0
    %508 = vmatpush1.bf16.msra.mxu0 %v373
    %509 = vmatprep.subr.bf16.mxu0 0
    %510 = vmatpush1.bf16.msra.mxu0 %v374
    %511 = vmatprep.subr.bf16.mxu0 0
    %512 = vmatpush1.bf16.msra.mxu0 %v375
    %513 = vmatprep.subr.bf16.mxu0 0
    %514 = vmatpush1.bf16.msra.mxu0 %v376
    %515 = vmatprep.subr.bf16.mxu0 0
    %516 = vmatpush1.bf16.msra.mxu0 %v377
    %517 = vmatprep.subr.bf16.mxu0 0
    %518 = vmatpush1.bf16.msra.mxu0 %v378
    %519 = vmatprep.subr.bf16.mxu0 0
    %520 = vmatpush1.bf16.msra.mxu0 %v379
    %521 = vmatprep.subr.bf16.mxu0 0
    %522 = vmatpush1.bf16.msra.mxu0 %v380
    %523 = vmatprep.subr.bf16.mxu0 0
    %524 = vmatpush1.bf16.msra.mxu0 %v381
    %525 = vmatprep.mubr.bf16.mxu0 %v45
    %526 = vmatmul.mubr.bf16.gmra.mrb[0].mxu0 %v44
    %v527 = vpop.f32.mrb[0].mxu0
    %v528 = vadd.f32 %v487, %v527
    %v529 = vpop.f32.mrb[0].mxu0
    %v530 = vpop.f32.mrb[0].mxu0
    %v531 = vadd.f32 %v490, %v530
    %v532 = vpop.f32.mrb[0].mxu0
    %533 = vdwg.mxu0
    %534 = vmatprep.subr.bf16.mxu0 0
    %535 = vmatpush1.bf16.msra.mxu0 %v382
    %536 = vmatprep.subr.bf16.mxu0 0
    %537 = vmatpush1.bf16.msra.mxu0 %v383
    %538 = vmatprep.subr.bf16.mxu0 0
    %539 = vmatpush1.bf16.msra.mxu0 %v384
    %540 = vmatprep.subr.bf16.mxu0 0
    %541 = vmatpush1.bf16.msra.mxu0 %v385
    %542 = vmatprep.subr.bf16.mxu0 0
    %543 = vmatpush1.bf16.msra.mxu0 %v386
    %544 = vmatprep.subr.bf16.mxu0 0
    %545 = vmatpush1.bf16.msra.mxu0 %v387
    %546 = vmatprep.subr.bf16.mxu0 0
    %547 = vmatpush1.bf16.msra.mxu0 %v388
    %548 = vmatprep.subr.bf16.mxu0 0
    %549 = vmatpush1.bf16.msra.mxu0 %v389
    %550 = vmatprep.subr.bf16.mxu0 0
    %551 = vmatpush1.bf16.msra.mxu0 %v390
    %552 = vmatprep.subr.bf16.mxu0 0
    %553 = vmatpush1.bf16.msra.mxu0 %v391
    %554 = vmatprep.subr.bf16.mxu0 0
    %555 = vmatpush1.bf16.msra.mxu0 %v392
    %556 = vmatprep.subr.bf16.mxu0 0
    %557 = vmatpush1.bf16.msra.mxu0 %v393
    %558 = vmatprep.subr.bf16.mxu0 0
    %559 = vmatpush1.bf16.msra.mxu0 %v394
    %560 = vmatprep.subr.bf16.mxu0 0
    %561 = vmatpush1.bf16.msra.mxu0 %v395
    %562 = vmatprep.subr.bf16.mxu0 0
    %563 = vmatpush1.bf16.msra.mxu0 %v396
    %564 = vmatprep.subr.bf16.mxu0 0
    %565 = vmatpush1.bf16.msra.mxu0 %v397
    %566 = vmatprep.mubr.bf16.mxu0 %v47
    %567 = vmatmul.mubr.bf16.gmra.mrb[0].mxu0 %v46
    %v568 = vpop.f32.mrb[0].mxu0
    %v569 = vadd.f32 %v528, %v568
    %v570 = vpop.f32.mrb[0].mxu0
    %v571 = vpop.f32.mrb[0].mxu0
    %v572 = vadd.f32 %v531, %v571
    %v573 = vpop.f32.mrb[0].mxu0
    %574 = vdwg.mxu0
    %575 = vmatprep.subr.bf16.mxu0 0
    %576 = vmatpush1.bf16.msra.mxu0 %v398
    %577 = vmatprep.subr.bf16.mxu0 0
    %578 = vmatpush1.bf16.msra.mxu0 0
    %579 = vmatprep.subr.bf16.mxu0 0
    %580 = vmatpush1.bf16.msra.mxu0 0
    %581 = vmatprep.subr.bf16.mxu0 0
    %582 = vmatpush1.bf16.msra.mxu0 0
    %583 = vmatprep.subr.bf16.mxu0 0
    %584 = vmatpush1.bf16.msra.mxu0 0
    %585 = vmatprep.subr.bf16.mxu0 0
    %586 = vmatpush1.bf16.msra.mxu0 0
    %587 = vmatprep.subr.bf16.mxu0 0
    %588 = vmatpush1.bf16.msra.mxu0 0
    %589 = vmatprep.subr.bf16.mxu0 0
    %590 = vmatpush1.bf16.msra.mxu0 0
    %591 = vmatprep.subr.bf16.mxu0 0
    %592 = vmatpush1.bf16.msra.mxu0 0
    %593 = vmatprep.subr.bf16.mxu0 0
    %594 = vmatpush1.bf16.msra.mxu0 0
    %595 = vmatprep.subr.bf16.mxu0 0
    %596 = vmatpush1.bf16.msra.mxu0 0
    %597 = vmatprep.subr.bf16.mxu0 0
    %598 = vmatpush1.bf16.msra.mxu0 0
    %599 = vmatprep.subr.bf16.mxu0 0
    %600 = vmatpush1.bf16.msra.mxu0 0
    %601 = vmatprep.subr.bf16.mxu0 0
    %602 = vmatpush1.bf16.msra.mxu0 0
    %603 = vmatprep.subr.bf16.mxu0 0
    %604 = vmatpush1.bf16.msra.mxu0 0
    %605 = vmatprep.subr.bf16.mxu0 0
    %606 = vmatpush1.bf16.msra.mxu0 0
    %607 = vmatprep.mubr.bf16.mxu0 0
    %608 = vmatmul.mubr.bf16.gmra.mrb[0].mxu0 %v450
    %v609 = vpop.f32.mrb[0].mxu0
    %v610 = vadd.f32 %v569, %v609
    %v611 = vpop.f32.mrb[0].mxu0
    %v612 = vpop.f32.mrb[0].mxu0
    %v613 = vadd.f32 %v572, %v612
    %v614 = vpop.f32.mrb[0].mxu0
    %615 = vdwg.mxu0
    %v616 = vmax.f32 %v610, 0.0
    %v617 = vmax.f32 %v613, 0.0
    %v618 = vpack.c.bf16 %v617, %v616
    %v619 = vld [vmem:[%s3] sm:$0xf]
    %v620 = vld [vmem:[%s3 + $0x4] sm:$0xf]
    %v621 = vld [vmem:[%s3 + $0x8] sm:$0xf]
    %v622 = vld [vmem:[%s3 + $0xc] sm:$0xf]
    %v623 = vld [vmem:[%s3 + $0x10] sm:$0xf]
    %v624 = vld [vmem:[%s3 + $0x14] sm:$0xf]
    %v625 = vld [vmem:[%s3 + $0x18] sm:$0xf]
    %v626 = vld [vmem:[%s3 + $0x1c] sm:$0xf]
    %v627 = vld [vmem:[%s4] sm:$0x1]
    %v629 = vlaneseq
    %v630 = vshrl.u32 %v629, 7
    %v631 = vsub.s32 0, %v630
    %v632 = vrot.slane %v627, %v631
    %v642 = vunpack.c.l.b16 %v619
    %v643 = vunpack.c.l.b16 %v620
    %v644 = vunpack.c.l.b16 %v621
    %v645 = vunpack.c.l.b16 %v622
    %v646 = vunpack.c.l.b16 %v623
    %v647 = vunpack.c.l.b16 %v624
    %v648 = vunpack.c.l.b16 %v625
    %v649 = vunpack.c.l.b16 %v626
    %v650 = vpack.c.b16 %v643, %v642
    %v651 = vpack.c.b16 %v645, %v644
    %v652 = vpack.c.b16 %v647, %v646
    %v653 = vpack.c.b16 %v649, %v648
    %vm658 = vcmask 523264
    %v660 = vsel %vm658, %v618, 0
    %662 = vmatprep.subr.bf16.mxu0 0
    %663 = vmatpush1.bf16.msra.mxu0 %v650
    %664 = vmatprep.subr.bf16.mxu0 0
    %665 = vmatpush1.bf16.msra.mxu0 %v651
    %666 = vmatprep.subr.bf16.mxu0 0
    %667 = vmatpush1.bf16.msra.mxu0 %v652
    %668 = vmatprep.subr.bf16.mxu0 0
    %669 = vmatpush1.bf16.msra.mxu0 %v653
    %670 = vmatprep.subr.bf16.mxu0 0
    %671 = vmatpush1.bf16.msra.mxu0 0
    %672 = vmatprep.subr.bf16.mxu0 0
    %673 = vmatpush1.bf16.msra.mxu0 0
    %674 = vmatprep.subr.bf16.mxu0 0
    %675 = vmatpush1.bf16.msra.mxu0 0
    %676 = vmatprep.subr.bf16.mxu0 0
    %677 = vmatpush1.bf16.msra.mxu0 0
    %678 = vmatprep.subr.bf16.mxu0 0
    %679 = vmatpush1.bf16.msra.mxu0 0
    %680 = vmatprep.subr.bf16.mxu0 0
    %681 = vmatpush1.bf16.msra.mxu0 0
    %682 = vmatprep.subr.bf16.mxu0 0
    %683 = vmatpush1.bf16.msra.mxu0 0
    %684 = vmatprep.subr.bf16.mxu0 0
    %685 = vmatpush1.bf16.msra.mxu0 0
    %686 = vmatprep.subr.bf16.mxu0 0
    %687 = vmatpush1.bf16.msra.mxu0 0
    %688 = vmatprep.subr.bf16.mxu0 0
    %689 = vmatpush1.bf16.msra.mxu0 0
    %690 = vmatprep.subr.bf16.mxu0 0
    %691 = vmatpush1.bf16.msra.mxu0 0
    %692 = vmatprep.subr.bf16.mxu0 0
    %693 = vmatpush1.bf16.msra.mxu0 0
    %694 = vmatprep.mubr.bf16.mxu0 0
    %695 = vmatmul.mubr.bf16.gmra.mrb[0].mxu0 %v660
    %v696 = vpop.f32.mrb[0].mxu0
    %v697 = vadd.f32 %v632, %v696
    %v698 = vpop.f32.mrb[0].mxu0
    %v699 = vpop.f32.mrb[0].mxu0
    %v700 = vadd.f32 %v632, %v699
    %v701 = vpop.f32.mrb[0].mxu0
    %702 = vdwg.mxu0
    %v703 = vmax.f32 %v697, 0.0
    %v704 = vmax.f32 %v700, 0.0
    %v705 = vpack.c.bf16 %v704, %v703
    %v706 = vld [vmem:[%s5] sm:$0xf]
    %v707 = vld [vmem:[%s5 + $0x4] sm:$0xf]
    %v708 = vld [vmem:[%s5 + $0x8] sm:$0xf]
    %v709 = vld [vmem:[%s5 + $0xc] sm:$0xf]
    %v710 = vld [vmem:[%s5 + $0x10] sm:$0xf]
    %v711 = vld [vmem:[%s5 + $0x14] sm:$0xf]
    %v712 = vld [vmem:[%s5 + $0x18] sm:$0xf]
    %v713 = vld [vmem:[%s5 + $0x1c] sm:$0xf]
    %v714 = vld [vmem:[%s6] sm:$0x1]
    %v716 = vlaneseq
    %v717 = vshrl.u32 %v716, 7
    %v718 = vsub.s32 0, %v717
    %v719 = vrot.slane %v714, %v718
    %v729 = vunpack.c.l.b16 %v706
    %v730 = vunpack.c.l.b16 %v707
    %v731 = vunpack.c.l.b16 %v708
    %v732 = vunpack.c.l.b16 %v709
    %v733 = vunpack.c.l.b16 %v710
    %v734 = vunpack.c.l.b16 %v711
    %v735 = vunpack.c.l.b16 %v712
    %v736 = vunpack.c.l.b16 %v713
    %v737 = vpack.c.b16 %v730, %v729
    %v738 = vpack.c.b16 %v732, %v731
    %v739 = vpack.c.b16 %v734, %v733
    %v740 = vpack.c.b16 %v736, %v735
    %v746 = vsel %vm658, %v705, 0
    %748 = vmatprep.subr.bf16.mxu0 0
    %749 = vmatpush1.bf16.msra.mxu0 %v737
    %750 = vmatprep.subr.bf16.mxu0 0
    %751 = vmatpush1.bf16.msra.mxu0 %v738
    %752 = vmatprep.subr.bf16.mxu0 0
    %753 = vmatpush1.bf16.msra.mxu0 %v739
    %754 = vmatprep.subr.bf16.mxu0 0
    %755 = vmatpush1.bf16.msra.mxu0 %v740
    %756 = vmatprep.subr.bf16.mxu0 0
    %757 = vmatpush1.bf16.msra.mxu0 0
    %758 = vmatprep.subr.bf16.mxu0 0
    %759 = vmatpush1.bf16.msra.mxu0 0
    %760 = vmatprep.subr.bf16.mxu0 0
    %761 = vmatpush1.bf16.msra.mxu0 0
    %762 = vmatprep.subr.bf16.mxu0 0
    %763 = vmatpush1.bf16.msra.mxu0 0
    %764 = vmatprep.subr.bf16.mxu0 0
    %765 = vmatpush1.bf16.msra.mxu0 0
    %766 = vmatprep.subr.bf16.mxu0 0
    %767 = vmatpush1.bf16.msra.mxu0 0
    %768 = vmatprep.subr.bf16.mxu0 0
    %769 = vmatpush1.bf16.msra.mxu0 0
    %770 = vmatprep.subr.bf16.mxu0 0
    %771 = vmatpush1.bf16.msra.mxu0 0
    %772 = vmatprep.subr.bf16.mxu0 0
    %773 = vmatpush1.bf16.msra.mxu0 0
    %774 = vmatprep.subr.bf16.mxu0 0
    %775 = vmatpush1.bf16.msra.mxu0 0
    %776 = vmatprep.subr.bf16.mxu0 0
    %777 = vmatpush1.bf16.msra.mxu0 0
    %778 = vmatprep.subr.bf16.mxu0 0
    %779 = vmatpush1.bf16.msra.mxu0 0
    %780 = vmatprep.mubr.bf16.mxu0 0
    %781 = vmatmul.mubr.bf16.gmra.mrb[0].mxu0 %v746
    %v782 = vpop.f32.mrb[0].mxu0
    %v783 = vadd.f32 %v719, %v782
    %v784 = vpop.f32.mrb[0].mxu0
    %v785 = vpop.f32.mrb[0].mxu0
    %v786 = vadd.f32 %v719, %v785
    %v787 = vpop.f32.mrb[0].mxu0
    %788 = vdwg.mxu0
    %v789 = vpack.c.bf16 %v786, %v783
    %v791 = vunpack.c.l.b16 %v789
    %v792 = vunpack.c.h.b16 %v789
    %v793 = vpack.c.b16 %v791, %v791
    %v794 = vpack.c.b16 %v792, %v792
    %797 = vst [vmem:[#allocation2] sm:$0xf] %v793
    %798 = vst [vmem:[#allocation2 + $0x4] sm:$0xf] %v794
    // Predicated region
    $region30: #{mlp_forward.1} parent=1 // pred_check
      _
    $region31: #{mlp_forward.1} parent=1 // pred_check_branch
      %800 = sbr.rel (0) target = $region33
    $region32: #{mlp_forward.1} parent=1 // pred_region
      %s802 = ssub.s32 128, 128
      %803 = vsyncadd [#allocation3], %s802
      %s804 = sshll.u32 [#allocation2], 4
      %s805 = int_to_ptr.vmem [resolvable:$true] %s804
      %810 = dma.vmem_to_hbm [thread:$0]  %s805, 128, %s7, [#allocation3], 64, 64, 4
    $region33: #{mlp_forward.1} parent=1 // pred_fallthru
      _
    // Predicated region
    $region34: #{mlp_forward.1} parent=1 // pred_check
      _
    $region35: #{mlp_forward.1} parent=1 // pred_check_branch
      %812 = sbr.rel (0) target = $region37
    $region36: #{mlp_forward.1} parent=1 // pred_region
      %813 = dma.done [#allocation3], 128
    $region37: #{mlp_forward.1} parent=1 // pred_fallthru
      _
    %814 = vsyncpa [#allocation3], 1

</llo_original>
